<compile_context>
chip_gen: v7x
topology: tpu7x:2x2x1
jax: 0.10.0
libtpu: 0.0.40
codegen_flags: <defaults>
</compile_context>

<pallas_src>
import math
import jax
import jax.numpy as jnp
from jax import lax
from jax.experimental import pallas as pl
from jax.experimental.pallas import tpu as pltpu


# ----------------------------- in-kernel helpers -----------------------------

def _ln(x, eps=1e-5):
    # un-affine LayerNorm: the (g, b) affine is folded into downstream weights.
    mu = jnp.mean(x, axis=-1, keepdims=True)
    xc = x - mu
    var = jnp.mean(xc * xc, axis=-1, keepdims=True)
    return xc * lax.rsqrt(var + eps)


def _gelu(x):
    # tanh-approx GELU: one EUP tanh instead of ~10 VPU ops for the erf form.
    c = math.sqrt(2.0 / math.pi)
    return 0.5 * x * (1.0 + jnp.tanh(c * (x + 0.044715 * x * x * x)))


def _mm(a, b, bf16):
    if bf16:
        a = a.astype(jnp.bfloat16)
        b = b.astype(jnp.bfloat16)
    return jnp.dot(a, b, preferred_element_type=jnp.float32)


# ------------------------------- K/V kernels ----------------------------------

def make_kv_kernel_sr(sr2, bf16):
    # xp_ref: (sr2, tkv, C) tap-major patches of LN1's raw input.
    # SR conv (kernel=stride=sr) = sum of sr2 per-tap (C x C) matmuls.
    def kernel(xp_ref, wsr_ref, bsr_ref, wkv_ref, bkv_ref, kv_ref):
        acc = None
        for t in range(sr2):
            part = _mm(_ln(xp_ref[t]), wsr_ref[t], bf16)
            acc = part if acc is None else acc + part
        xkv = _ln(acc + bsr_ref[...])                      # attn.norm (affine folded)
        kv_ref[...] = (_mm(xkv, wkv_ref[...], bf16) + bkv_ref[...]).astype(kv_ref.dtype)
    return kernel


def make_kv_kernel_id(bf16):
    def kernel(x_ref, wkv_ref, bkv_ref, kv_ref):
        kv_ref[...] = (_mm(_ln(x_ref[...]), wkv_ref[...], bf16)
                       + bkv_ref[...]).astype(kv_ref.dtype)
    return kernel


# ----------------------------- attention kernel ------------------------------

def make_attn_kernel(head, C, bf16):
    dh = C // head

    def kernel(xq_ref, kv_ref, wq_ref, bq_ref, wp_ref, bp_ref, out_ref):
        xq = xq_ref[...]                                    # (tq, C) residual, f32
        # LN1 affine and the attention scale are folded into wq/bq.
        q = _mm(_ln(xq), wq_ref[...], bf16) + bq_ref[...]
        kv = kv_ref[...]                                    # (nk, 2C) precomputed
        k = kv[:, :C]
        v = kv[:, C:]
        acc = jnp.zeros((xq.shape[0], C), jnp.float32)
        for h in range(head):
            qh = q[:, h * dh:(h + 1) * dh]
            kh = k[:, h * dh:(h + 1) * dh]
            vh = v[:, h * dh:(h + 1) * dh]
            if bf16:
                qh = qh.astype(jnp.bfloat16)
                kh = kh.astype(jnp.bfloat16)
            s = lax.dot_general(qh, kh, (((1,), (1,)), ((), ())),
                                preferred_element_type=jnp.float32)
            s = s - jnp.max(s, axis=-1, keepdims=True)
            pr = jnp.exp(s)
            pr = pr * pl.reciprocal(jnp.sum(pr, axis=-1, keepdims=True), approx=True)
            # per-head accumulation into the projection output: no lane-axis concat
            acc = acc + _mm(_mm(pr, vh, bf16), wp_ref[h * dh:(h + 1) * dh, :], bf16)
        out_ref[...] = xq + acc + bp_ref[...]

    return kernel


# -------------------------------- MLP kernel ---------------------------------

def make_mlp_kernel(H, W, C, C4, th, bf16):
    n_main = th * W
    n_ext = (th + 2) * W          # tile rows + 1 halo row above + 1 below

    def kernel(xm_ref, xt_ref, xb_ref, w1_ref, b1_ref, wdw_ref, bdw_ref,
               w2_ref, b2_ref, out_ref):
        t = pl.program_id(1)
        T = pl.num_programs(1)

        xm = xm_ref[...].reshape(n_main, C)                # (th*W, C) residual / LN2 in

        def fc1(z):
            return _mm(_ln(z), w1_ref[...], bf16) + b1_ref[...]

        hm = fc1(xm)                                       # (th*W, C4)
        # halo rows (image rows just above/below the tile); zeroed at the image
        # boundary so they reproduce the 3x3 conv's zero padding.
        top_valid = jnp.where(t > 0, 1.0, 0.0)
        bot_valid = jnp.where(t < T - 1, 1.0, 0.0)
        ht = fc1(xt_ref[...]) * top_valid                  # (W, C4)
        hb = fc1(xb_ref[...]) * bot_valid                  # (W, C4)
        hext = jnp.concatenate([ht, hm, hb], axis=0)       # ((th+2)*W, C4)

        # 3x3 depthwise conv (stride 1, pad 1) on the flat token layout:
        # 2 XLU rolls + 2 column masks (built once, reused for all 3 row offsets),
        # then 9 aligned slices + FMAs on the main rows only.
        col = lax.broadcasted_iota(jnp.int32, (n_ext, 1), 0) % W
        acc = jnp.zeros((n_main, C4), jnp.float32)
        for dj in (-1, 0, 1):
            if dj == 0:
                shifted = hext
            else:
                shifted = pltpu.roll(hext, (-dj) % n_ext, 0)
                valid = (col + dj >= 0) & (col + dj <= W - 1)
                shifted = jnp.where(valid, shifted, 0.0)
            for di in (-1, 0, 1):
                start = (di + 1) * W                       # 0, W, 2W (static)
                kidx = (di + 1) * 3 + (dj + 1)
                acc = acc + shifted[start:start + n_main, :] * wdw_ref[kidx:kidx + 1, :]
        conv = acc + bdw_ref[...]

        y = _mm(_gelu(conv), w2_ref[...], bf16) + b2_ref[...]
        out_ref[...] = (xm + y).reshape(th, W, C)

    return kernel


# ------------------------------ pallas_call glue ------------------------------

def _pick_divisor(n, target, align):
    t = min(n, max(1, target))
    while t > 1:
        if n % t == 0 and (t % align == 0 or t == n):
            return t
        t -= 1
    return n


def _chip_config():
    try:
        cap = int(pltpu.get_tpu_info().vmem_capacity_bytes)
    except Exception:
        cap = 64 * 1024 * 1024                      # conservative (v7x) fallback
    vmem_limit = min(int(cap * 3 // 4), 112 * 1024 * 1024)   # 48 MiB on v7x, ~96 MiB on v5e/v6e
    big_vmem = cap >= 96 * 1024 * 1024
    return vmem_limit, big_vmem


def block_forward(x, p, H, W, head, sr_ratio, q_tile=None, row_tile=None,
                  kv_tile=None, use_bf16_mxu=True):
    B, N, C = x.shape
    assert N == H * W, "N must equal H * W"
    assert C % head == 0
    C4 = p['w1m'].shape[1]
    dh = C // head
    scale = dh ** (-0.5)
    f32 = jnp.float32
    wdt = jnp.bfloat16 if use_bf16_mxu else f32
    kv_dtype = jnp.bfloat16 if use_bf16_mxu else f32
    hp = lax.Precision.HIGHEST

    vmem_limit, big_vmem = _chip_config()

    # ---- fold LN affines + attention scale into the adjacent weights (host-side) ----
    g1 = p['g1'].reshape(C, 1); b1 = p['b1'].reshape(1, C)
    g2 = p['g2'].reshape(C, 1); b2 = p['b2'].reshape(1, C)

    wq = ((g1 * p['wq']) * scale).astype(wdt)
    bq = (jnp.dot(b1, p['wq'], precision=hp) + p['bq']) * scale

    if sr_ratio > 1:
        gsr = p['gsr'].reshape(C, 1); bsrn = p['bsrn'].reshape(1, C)
        wsr = (g1[None, :, :] * p['wsr']).astype(wdt)           # (sr2, C_in, C_out)
        bsr = jnp.dot(b1, p['wsr'].sum(0), precision=hp) + p['bsr']
        wkv = (gsr * p['wkv']).astype(wdt)
        bkv = jnp.dot(bsrn, p['wkv'], precision=hp) + p['bkv']
    else:
        wkv = (g1 * p['wkv']).astype(wdt)
        bkv = jnp.dot(b1, p['wkv'], precision=hp) + p['bkv']

    wp = p['wp'].astype(wdt); bp = p['bp']
    w1m = (g2 * p['w1m']).astype(wdt)
    b1m = jnp.dot(b2, p['w1m'], precision=hp) + p['b1m']
    w2m = p['w2m'].astype(wdt); b2m = p['b2m']
    wdw = p['wdw']; bdw = p['bdw']                              # VPU weights: keep f32

    # ---------------- stage 1: K/V, shared by all query tiles ----------------
    if sr_ratio > 1:
        sr = sr_ratio
        assert H % sr == 0 and W % sr == 0, "sr_ratio must divide H and W"
        sr2 = sr * sr
        nk = (H // sr) * (W // sr)
        # tap-major patch gather (pure XLA index permutation): each tap is a
        # contiguous lane-dense (nk, C) slab inside the kernel (no relayout).
        xp = x.reshape(B, H // sr, sr, W // sr, sr, C)
        xp = xp.transpose(0, 2, 4, 1, 3, 5).reshape(B, sr2, nk, C)

        tkv = kv_tile or _pick_divisor(nk, 1024 if big_vmem else 512, 8)
        assert nk % tkv == 0 and (tkv % 8 == 0 or tkv == nk)
        kv_params = [wsr, bsr, wkv, bkv]
        kv = pl.pallas_call(
            make_kv_kernel_sr(sr2, use_bf16_mxu),
            out_shape=jax.ShapeDtypeStruct((B, nk, 2 * C), kv_dtype),
            grid=(B, nk // tkv),
            in_specs=[pl.BlockSpec((None, sr2, tkv, C), lambda b, i: (b, 0, i, 0))]
                     + [pl.BlockSpec(a.shape, lambda b, i, nd=a.ndim: (0,) * nd)
                        for a in kv_params],
            out_specs=pl.BlockSpec((None, tkv, 2 * C), lambda b, i: (b, i, 0)),
            compiler_params=pltpu.CompilerParams(
                dimension_semantics=("parallel", "parallel"),
                vmem_limit_bytes=vmem_limit),
        )(xp, *kv_params)
    else:
        nk = N
        tkv = kv_tile or _pick_divisor(N, 1024 if big_vmem else 512, 8)
        assert N % tkv == 0 and (tkv % 8 == 0 or tkv == N)
        kv_params = [wkv, bkv]
        kv = pl.pallas_call(
            make_kv_kernel_id(use_bf16_mxu),
            out_shape=jax.ShapeDtypeStruct((B, nk, 2 * C), kv_dtype),
            grid=(B, nk // tkv),
            in_specs=[pl.BlockSpec((None, tkv, C), lambda b, i: (b, i, 0))]
                     + [pl.BlockSpec(a.shape, lambda b, i, nd=a.ndim: (0,) * nd)
                        for a in kv_params],
            out_specs=pl.BlockSpec((None, tkv, 2 * C), lambda b, i: (b, i, 0)),
            compiler_params=pltpu.CompilerParams(
                dimension_semantics=("parallel", "parallel"),
                vmem_limit_bytes=vmem_limit),
        )(x, *kv_params)

    # ---------------- stage 2: x = x + Attn(LN1(x)) ----------------
    if q_tile is None:
        # bound the (q_tile, nk) score / exp f32 temporaries against VMEM
        tq_cap = max(8, (vmem_limit // 3) // max(nk * 4 * 3, 1))
        q_tile = _pick_divisor(N, min(1024 if big_vmem else 512, tq_cap), 8)
    assert N % q_tile == 0 and (q_tile % 8 == 0 or q_tile == N)

    a_params = [wq, bq, wp, bp]
    x1 = pl.pallas_call(
        make_attn_kernel(head, C, use_bf16_mxu),
        out_shape=jax.ShapeDtypeStruct((B, N, C), f32),
        grid=(B, N // q_tile),
        in_specs=[pl.BlockSpec((None, q_tile, C), lambda b, qi: (b, qi, 0)),
                  pl.BlockSpec((None, nk, 2 * C), lambda b, qi: (b, 0, 0))]
                 + [pl.BlockSpec(a.shape, lambda b, qi, nd=a.ndim: (0,) * nd)
                    for a in a_params],
        out_specs=pl.BlockSpec((None, q_tile, C), lambda b, qi: (b, qi, 0)),
        compiler_params=pltpu.CompilerParams(
            # KV is precomputed -> no cross-tile scratch -> query axis is parallel
            dimension_semantics=("parallel", "parallel"),
            vmem_limit_bytes=vmem_limit),
    )(x, kv, *a_params)

    # ---------------- stage 3: x = x + fc2(GELU(DWConv(fc1(LN2(x))))) ----------------
    if row_tile is None:
        tok_target = 4096 if big_vmem else 1536
        per_row = W * (C * 4 * 4 + C4 * 4 * 5)          # rough per-image-row working set
        rows_cap = max(1, (vmem_limit // 2) // max(per_row, 1))
        row_tile = _pick_divisor(H, min(max(1, tok_target // W), rows_cap), 1)
    assert H % row_tile == 0
    th = row_tile

    x1hw = x1.reshape(B, H, W, C)
    main_spec = pl.BlockSpec((None, th, W, C), lambda b, t: (b, t, 0, 0))
    top_spec = pl.BlockSpec((None, None, W, C),
                            lambda b, t: (b, jnp.maximum(t * th - 1, 0), 0, 0))
    bot_spec = pl.BlockSpec((None, None, W, C),
                            lambda b, t: (b, jnp.minimum(t * th + th, H - 1), 0, 0))
    m_params = [w1m, b1m, wdw, bdw, w2m, b2m]
    out = pl.pallas_call(
        make_mlp_kernel(H, W, C, C4, th, use_bf16_mxu),
        out_shape=jax.ShapeDtypeStruct((B, H, W, C), f32),
        grid=(B, H // th),
        in_specs=[main_spec, top_spec, bot_spec]
                 + [pl.BlockSpec(a.shape, lambda b, t, nd=a.ndim: (0,) * nd)
                    for a in m_params],
        out_specs=main_spec,
        compiler_params=pltpu.CompilerParams(
            dimension_semantics=("parallel", "parallel"),
            vmem_limit_bytes=vmem_limit),
    )(x1hw, x1hw, x1hw, *m_params)

    # TODO(synk): for C < 128 stages a lane-dense (..., W*C/128, 128) output view
    # would avoid masked vst.msk partial stores; left as a follow-up relayout change.
    return out.reshape(B, N, C)


# ------------------------- pure-JAX reference (for checking) -------------------------

def block_reference(x, p, H, W, head, sr_ratio):
    B, N, C = x.shape
    dh = C // head
    scale = dh ** (-0.5)

    def ln(z, g, b, eps=1e-5):
        mu = z.mean(-1, keepdims=True)
        var = ((z - mu) ** 2).mean(-1, keepdims=True)
        return (z - mu) / jnp.sqrt(var + eps) * g + b

    xn = ln(x, p['g1'], p['b1'])
    q = xn @ p['wq'] + p['bq']
    if sr_ratio > 1:
        sr = sr_ratio
        img = xn.reshape(B, H, W, C)
        pat = img.reshape(B, H // sr, sr, W // sr, sr, C)
        pat = pat.transpose(0, 1, 3, 2, 4, 5).reshape(B, -1, sr * sr * C)
        xs = pat @ p['wsr'].reshape(sr * sr * C, C) + p['bsr']
        xkv = ln(xs, p['gsr'], p['bsrn'])
    else:
        xkv = xn
    kv = xkv @ p['wkv'] + p['bkv']
    k, v = kv[..., :C], kv[..., C:]
    qh = q.reshape(B, N, head, dh).transpose(0, 2, 1, 3)
    kh = k.reshape(B, -1, head, dh).transpose(0, 2, 1, 3)
    vh = v.reshape(B, -1, head, dh).transpose(0, 2, 1, 3)
    att = jax.nn.softmax(jnp.einsum('bhnd,bhmd->bhnm', qh, kh) * scale, axis=-1)
    o = jnp.einsum('bhnm,bhmd->bhnd', att, vh).transpose(0, 2, 1, 3).reshape(B, N, C)
    x = x + o @ p['wp'] + p['bp']

    xn2 = ln(x, p['g2'], p['b2'])
    h = xn2 @ p['w1m'] + p['b1m']
    C4 = h.shape[-1]
    img = h.reshape(B, H, W, C4)
    pad = jnp.pad(img, ((0, 0), (1, 1), (1, 1), (0, 0)))
    conv = jnp.zeros_like(img)
    for ki in range(3):
        for kj in range(3):
            conv = conv + pad[:, ki:ki + H, kj:kj + W, :] * p['wdw'][ki * 3 + kj]
    conv = conv + p['bdw']
    g = jax.nn.gelu(conv.reshape(B, N, C4), approximate=False)
    return x + g @ p['w2m'] + p['b2m']


# ------------------------------------ main ------------------------------------

if __name__ == "__main__":
    B, C, head, sr = 2, 32, 2, 2
    H = W = 8
    N = H * W
    C4 = 4 * C

    keys = jax.random.split(jax.random.PRNGKey(0), 21)
    s = 0.05
    # weights are stored in (in, out) layout; conv weights pre-permuted:
    #   wsr[(ki*sr+kj), c_in, c_out]  <->  torch Conv2d weight[c_out, c_in, ki, kj]
    #   wdw[(ki*3 +kj), c]            <->  torch depthwise weight[c, 0, ki, kj]
    p = {
        'g1':   1.0 + 0.1 * jax.random.normal(keys[0], (1, C), jnp.float32),
        'b1':   0.1 * jax.random.normal(keys[1], (1, C), jnp.float32),
        'wq':   s * jax.random.normal(keys[2], (C, C), jnp.float32),
        'bq':   s * jax.random.normal(keys[3], (1, C), jnp.float32),
        'wkv':  s * jax.random.normal(keys[4], (C, 2 * C), jnp.float32),
        'bkv':  s * jax.random.normal(keys[5], (1, 2 * C), jnp.float32),
        'wp':   s * jax.random.normal(keys[6], (C, C), jnp.float32),
        'bp':   s * jax.random.normal(keys[7], (1, C), jnp.float32),
        'wsr':  s * jax.random.normal(keys[8], (sr * sr, C, C), jnp.float32),
        'bsr':  s * jax.random.normal(keys[9], (1, C), jnp.float32),
        'gsr':  1.0 + 0.1 * jax.random.normal(keys[10], (1, C), jnp.float32),
        'bsrn': 0.1 * jax.random.normal(keys[11], (1, C), jnp.float32),
        'g2':   1.0 + 0.1 * jax.random.normal(keys[12], (1, C), jnp.float32),
        'b2':   0.1 * jax.random.normal(keys[13], (1, C), jnp.float32),
        'w1m':  s * jax.random.normal(keys[14], (C, C4), jnp.float32),
        'b1m':  s * jax.random.normal(keys[15], (1, C4), jnp.float32),
        'wdw':  s * jax.random.normal(keys[16], (9, C4), jnp.float32),
        'bdw':  s * jax.random.normal(keys[17], (1, C4), jnp.float32),
        'w2m':  s * jax.random.normal(keys[18], (C4, C), jnp.float32),
        'b2m':  s * jax.random.normal(keys[19], (1, C), jnp.float32),
    }
    x = jax.random.normal(keys[20], (B, N, C), jnp.float32)

    # small explicit tiles so the multi-tile grid / halo / mask paths are exercised,
    # plus one run with automatic (per-chip) tile selection
    y_sr = block_forward(x, p, H, W, head, sr_ratio=sr, q_tile=16, row_tile=2, kv_tile=8)
    y_id = block_forward(x, p, H, W, head, sr_ratio=1, q_tile=16, row_tile=2, kv_tile=8)
    y_def = block_forward(x, p, H, W, head, sr_ratio=sr)
    jax.block_until_ready((y_sr, y_id, y_def))

    assert y_sr.shape == (B, N, C) and y_id.shape == (B, N, C) and y_def.shape == (B, N, C)

    # tolerance-check against a pure-JAX f32 reference; tolerance accounts for the
    # bf16 MXU operands, tanh GELU and approx reciprocal used in the kernels.
    with jax.default_matmul_precision("highest"):
        r_sr = block_reference(x, p, H, W, head, sr)
        r_id = block_reference(x, p, H, W, head, 1)
    err_sr = float(jnp.max(jnp.abs(y_sr - r_sr)))
    err_id = float(jnp.max(jnp.abs(y_id - r_id)))
    err_def = float(jnp.max(jnp.abs(y_def - r_sr)))
    tol = 1.5e-2
    assert err_sr < tol and err_id < tol and err_def < tol, (err_sr, err_id, err_def)

    print("KERNEL_OK")
</pallas_src>

<mosaic_0001>
module attributes {stable_mosaic.version = 11 : i64} {
  func.func @kernel(%arg0: i32, %arg1: i32, %arg2: memref<1x4x8x32xf32, #tpu.memory_space<vmem>>, %arg3: memref<4x32x32xbf16, #tpu.memory_space<vmem>>, %arg4: memref<1x32xf32, #tpu.memory_space<vmem>>, %arg5: memref<32x64xbf16, #tpu.memory_space<vmem>>, %arg6: memref<1x64xf32, #tpu.memory_space<vmem>>, %arg7: memref<1x8x64xbf16, #tpu.memory_space<vmem>>) attributes {dimension_semantics = [#tpu.dimension_semantics<parallel>, #tpu.dimension_semantics<parallel>], iteration_bounds = array<i64: 2, 2>, scalar_prefetch = 0 : i64, scratch_operands = 0 : i64, tpu.core_type = #tpu.core_type<tc>, window_params = [{transform_indices = @transform_0, window_bounds = array<i64: 1, 4, 8, 32>}, {pipeline_mode = #tpu.pipeline_mode<synchronous>, transform_indices = @transform_1, window_bounds = array<i64: 4, 32, 32>}, {pipeline_mode = #tpu.pipeline_mode<synchronous>, transform_indices = @transform_2, window_bounds = array<i64: 1, 32>}, {pipeline_mode = #tpu.pipeline_mode<synchronous>, transform_indices = @transform_3, window_bounds = array<i64: 32, 64>}, {pipeline_mode = #tpu.pipeline_mode<synchronous>, transform_indices = @transform_4, window_bounds = array<i64: 1, 64>}, {transform_indices = @transform_5, window_bounds = array<i64: 1, 8, 64>}]} {
    %c0 = arith.constant 0 : index
    %c0_0 = arith.constant 0 : index
    %c0_1 = arith.constant 0 : index
    %c0_2 = arith.constant 0 : index
    %0 = vector.load %arg2[%c0, %c0_0, %c0_1, %c0_2] : memref<1x4x8x32xf32, #tpu.memory_space<vmem>>, vector<1x1x8x32xf32>
    %1 = vector.shape_cast %0 : vector<1x1x8x32xf32> to vector<8x32xf32>
    %cst = arith.constant dense<0.000000e+00> : vector<8xf32>
    %2 = vector.multi_reduction <add>, %1, %cst [1] : vector<8x32xf32> to vector<8xf32>
    %3 = vector.shape_cast %2 : vector<8xf32> to vector<8x1xf32>
    %cst_3 = arith.constant 3.200000e+01 : f32
    %4 = vector.broadcast %cst_3 : f32 to vector<8x1xf32>
    %5 = arith.divf %3, %4 : vector<8x1xf32>
    %6 = vector.broadcast %5 : vector<8x1xf32> to vector<8x32xf32>
    %7 = arith.subf %1, %6 : vector<8x32xf32>
    %8 = arith.mulf %7, %7 : vector<8x32xf32>
    %cst_4 = arith.constant dense<0.000000e+00> : vector<8xf32>
    %9 = vector.multi_reduction <add>, %8, %cst_4 [1] : vector<8x32xf32> to vector<8xf32>
    %10 = vector.shape_cast %9 : vector<8xf32> to vector<8x1xf32>
    %cst_5 = arith.constant 3.200000e+01 : f32
    %11 = vector.broadcast %cst_5 : f32 to vector<8x1xf32>
    %12 = arith.divf %10, %11 : vector<8x1xf32>
    %cst_6 = arith.constant 9.99999974E-6 : f32
    %13 = vector.broadcast %cst_6 : f32 to vector<8x1xf32>
    %14 = arith.addf %12, %13 : vector<8x1xf32>
    %15 = math.rsqrt %14 : vector<8x1xf32>
    %16 = vector.broadcast %15 : vector<8x1xf32> to vector<8x32xf32>
    %17 = arith.mulf %7, %16 : vector<8x32xf32>
    %c0_7 = arith.constant 0 : index
    %c0_8 = arith.constant 0 : index
    %c0_9 = arith.constant 0 : index
    %18 = vector.load %arg3[%c0_7, %c0_8, %c0_9] : memref<4x32x32xbf16, #tpu.memory_space<vmem>>, vector<1x32x32xbf16>
    %19 = vector.shape_cast %18 : vector<1x32x32xbf16> to vector<32x32xbf16>
    %20 = arith.truncf %17 : vector<8x32xf32> to vector<8x32xbf16>
    %cst_10 = arith.constant dense<0.000000e+00> : vector<8x32xf32>
    %21 = tpu.matmul %20, %19, %cst_10 {dimension_numbers = #tpu.dot_dimension_numbers<[1], [0], [0], [1], [0, 0, 1, 1], [], []>} : vector<8x32xbf16>, vector<32x32xbf16>, vector<8x32xf32> -> vector<8x32xf32>
    %c0_11 = arith.constant 0 : index
    %c1 = arith.constant 1 : index
    %c0_12 = arith.constant 0 : index
    %c0_13 = arith.constant 0 : index
    %22 = vector.load %arg2[%c0_11, %c1, %c0_12, %c0_13] : memref<1x4x8x32xf32, #tpu.memory_space<vmem>>, vector<1x1x8x32xf32>
    %23 = vector.shape_cast %22 : vector<1x1x8x32xf32> to vector<8x32xf32>
    %cst_14 = arith.constant dense<0.000000e+00> : vector<8xf32>
    %24 = vector.multi_reduction <add>, %23, %cst_14 [1] : vector<8x32xf32> to vector<8xf32>
    %25 = vector.shape_cast %24 : vector<8xf32> to vector<8x1xf32>
    %cst_15 = arith.constant 3.200000e+01 : f32
    %26 = vector.broadcast %cst_15 : f32 to vector<8x1xf32>
    %27 = arith.divf %25, %26 : vector<8x1xf32>
    %28 = vector.broadcast %27 : vector<8x1xf32> to vector<8x32xf32>
    %29 = arith.subf %23, %28 : vector<8x32xf32>
    %30 = arith.mulf %29, %29 : vector<8x32xf32>
    %cst_16 = arith.constant dense<0.000000e+00> : vector<8xf32>
    %31 = vector.multi_reduction <add>, %30, %cst_16 [1] : vector<8x32xf32> to vector<8xf32>
    %32 = vector.shape_cast %31 : vector<8xf32> to vector<8x1xf32>
    %cst_17 = arith.constant 3.200000e+01 : f32
    %33 = vector.broadcast %cst_17 : f32 to vector<8x1xf32>
    %34 = arith.divf %32, %33 : vector<8x1xf32>
    %cst_18 = arith.constant 9.99999974E-6 : f32
    %35 = vector.broadcast %cst_18 : f32 to vector<8x1xf32>
    %36 = arith.addf %34, %35 : vector<8x1xf32>
    %37 = math.rsqrt %36 : vector<8x1xf32>
    %38 = vector.broadcast %37 : vector<8x1xf32> to vector<8x32xf32>
    %39 = arith.mulf %29, %38 : vector<8x32xf32>
    %c1_19 = arith.constant 1 : index
    %c0_20 = arith.constant 0 : index
    %c0_21 = arith.constant 0 : index
    %40 = vector.load %arg3[%c1_19, %c0_20, %c0_21] : memref<4x32x32xbf16, #tpu.memory_space<vmem>>, vector<1x32x32xbf16>
    %41 = vector.shape_cast %40 : vector<1x32x32xbf16> to vector<32x32xbf16>
    %42 = arith.truncf %39 : vector<8x32xf32> to vector<8x32xbf16>
    %cst_22 = arith.constant dense<0.000000e+00> : vector<8x32xf32>
    %43 = tpu.matmul %42, %41, %cst_22 {dimension_numbers = #tpu.dot_dimension_numbers<[1], [0], [0], [1], [0, 0, 1, 1], [], []>} : vector<8x32xbf16>, vector<32x32xbf16>, vector<8x32xf32> -> vector<8x32xf32>
    %44 = arith.addf %21, %43 : vector<8x32xf32>
    %c0_23 = arith.constant 0 : index
    %c2 = arith.constant 2 : index
    %c0_24 = arith.constant 0 : index
    %c0_25 = arith.constant 0 : index
    %45 = vector.load %arg2[%c0_23, %c2, %c0_24, %c0_25] : memref<1x4x8x32xf32, #tpu.memory_space<vmem>>, vector<1x1x8x32xf32>
    %46 = vector.shape_cast %45 : vector<1x1x8x32xf32> to vector<8x32xf32>
    %cst_26 = arith.constant dense<0.000000e+00> : vector<8xf32>
    %47 = vector.multi_reduction <add>, %46, %cst_26 [1] : vector<8x32xf32> to vector<8xf32>
    %48 = vector.shape_cast %47 : vector<8xf32> to vector<8x1xf32>
    %cst_27 = arith.constant 3.200000e+01 : f32
    %49 = vector.broadcast %cst_27 : f32 to vector<8x1xf32>
    %50 = arith.divf %48, %49 : vector<8x1xf32>
    %51 = vector.broadcast %50 : vector<8x1xf32> to vector<8x32xf32>
    %52 = arith.subf %46, %51 : vector<8x32xf32>
    %53 = arith.mulf %52, %52 : vector<8x32xf32>
    %cst_28 = arith.constant dense<0.000000e+00> : vector<8xf32>
    %54 = vector.multi_reduction <add>, %53, %cst_28 [1] : vector<8x32xf32> to vector<8xf32>
    %55 = vector.shape_cast %54 : vector<8xf32> to vector<8x1xf32>
    %cst_29 = arith.constant 3.200000e+01 : f32
    %56 = vector.broadcast %cst_29 : f32 to vector<8x1xf32>
    %57 = arith.divf %55, %56 : vector<8x1xf32>
    %cst_30 = arith.constant 9.99999974E-6 : f32
    %58 = vector.broadcast %cst_30 : f32 to vector<8x1xf32>
    %59 = arith.addf %57, %58 : vector<8x1xf32>
    %60 = math.rsqrt %59 : vector<8x1xf32>
    %61 = vector.broadcast %60 : vector<8x1xf32> to vector<8x32xf32>
    %62 = arith.mulf %52, %61 : vector<8x32xf32>
    %c2_31 = arith.constant 2 : index
    %c0_32 = arith.constant 0 : index
    %c0_33 = arith.constant 0 : index
    %63 = vector.load %arg3[%c2_31, %c0_32, %c0_33] : memref<4x32x32xbf16, #tpu.memory_space<vmem>>, vector<1x32x32xbf16>
    %64 = vector.shape_cast %63 : vector<1x32x32xbf16> to vector<32x32xbf16>
    %65 = arith.truncf %62 : vector<8x32xf32> to vector<8x32xbf16>
    %cst_34 = arith.constant dense<0.000000e+00> : vector<8x32xf32>
    %66 = tpu.matmul %65, %64, %cst_34 {dimension_numbers = #tpu.dot_dimension_numbers<[1], [0], [0], [1], [0, 0, 1, 1], [], []>} : vector<8x32xbf16>, vector<32x32xbf16>, vector<8x32xf32> -> vector<8x32xf32>
    %67 = arith.addf %44, %66 : vector<8x32xf32>
    %c0_35 = arith.constant 0 : index
    %c3 = arith.constant 3 : index
    %c0_36 = arith.constant 0 : index
    %c0_37 = arith.constant 0 : index
    %68 = vector.load %arg2[%c0_35, %c3, %c0_36, %c0_37] : memref<1x4x8x32xf32, #tpu.memory_space<vmem>>, vector<1x1x8x32xf32>
    %69 = vector.shape_cast %68 : vector<1x1x8x32xf32> to vector<8x32xf32>
    %cst_38 = arith.constant dense<0.000000e+00> : vector<8xf32>
    %70 = vector.multi_reduction <add>, %69, %cst_38 [1] : vector<8x32xf32> to vector<8xf32>
    %71 = vector.shape_cast %70 : vector<8xf32> to vector<8x1xf32>
    %cst_39 = arith.constant 3.200000e+01 : f32
    %72 = vector.broadcast %cst_39 : f32 to vector<8x1xf32>
    %73 = arith.divf %71, %72 : vector<8x1xf32>
    %74 = vector.broadcast %73 : vector<8x1xf32> to vector<8x32xf32>
    %75 = arith.subf %69, %74 : vector<8x32xf32>
    %76 = arith.mulf %75, %75 : vector<8x32xf32>
    %cst_40 = arith.constant dense<0.000000e+00> : vector<8xf32>
    %77 = vector.multi_reduction <add>, %76, %cst_40 [1] : vector<8x32xf32> to vector<8xf32>
    %78 = vector.shape_cast %77 : vector<8xf32> to vector<8x1xf32>
    %cst_41 = arith.constant 3.200000e+01 : f32
    %79 = vector.broadcast %cst_41 : f32 to vector<8x1xf32>
    %80 = arith.divf %78, %79 : vector<8x1xf32>
    %cst_42 = arith.constant 9.99999974E-6 : f32
    %81 = vector.broadcast %cst_42 : f32 to vector<8x1xf32>
    %82 = arith.addf %80, %81 : vector<8x1xf32>
    %83 = math.rsqrt %82 : vector<8x1xf32>
    %84 = vector.broadcast %83 : vector<8x1xf32> to vector<8x32xf32>
    %85 = arith.mulf %75, %84 : vector<8x32xf32>
    %c3_43 = arith.constant 3 : index
    %c0_44 = arith.constant 0 : index
    %c0_45 = arith.constant 0 : index
    %86 = vector.load %arg3[%c3_43, %c0_44, %c0_45] : memref<4x32x32xbf16, #tpu.memory_space<vmem>>, vector<1x32x32xbf16>
    %87 = vector.shape_cast %86 : vector<1x32x32xbf16> to vector<32x32xbf16>
    %88 = arith.truncf %85 : vector<8x32xf32> to vector<8x32xbf16>
    %cst_46 = arith.constant dense<0.000000e+00> : vector<8x32xf32>
    %89 = tpu.matmul %88, %87, %cst_46 {dimension_numbers = #tpu.dot_dimension_numbers<[1], [0], [0], [1], [0, 0, 1, 1], [], []>} : vector<8x32xbf16>, vector<32x32xbf16>, vector<8x32xf32> -> vector<8x32xf32>
    %90 = arith.addf %67, %89 : vector<8x32xf32>
    %c0_47 = arith.constant 0 : index
    %c0_48 = arith.constant 0 : index
    %91 = vector.load %arg4[%c0_47, %c0_48] : memref<1x32xf32, #tpu.memory_space<vmem>>, vector<1x32xf32>
    %92 = vector.broadcast %91 : vector<1x32xf32> to vector<8x32xf32>
    %93 = arith.addf %90, %92 : vector<8x32xf32>
    %cst_49 = arith.constant dense<0.000000e+00> : vector<8xf32>
    %94 = vector.multi_reduction <add>, %93, %cst_49 [1] : vector<8x32xf32> to vector<8xf32>
    %95 = vector.shape_cast %94 : vector<8xf32> to vector<8x1xf32>
    %cst_50 = arith.constant 3.200000e+01 : f32
    %96 = vector.broadcast %cst_50 : f32 to vector<8x1xf32>
    %97 = arith.divf %95, %96 : vector<8x1xf32>
    %98 = vector.broadcast %97 : vector<8x1xf32> to vector<8x32xf32>
    %99 = arith.subf %93, %98 : vector<8x32xf32>
    %100 = arith.mulf %99, %99 : vector<8x32xf32>
    %cst_51 = arith.constant dense<0.000000e+00> : vector<8xf32>
    %101 = vector.multi_reduction <add>, %100, %cst_51 [1] : vector<8x32xf32> to vector<8xf32>
    %102 = vector.shape_cast %101 : vector<8xf32> to vector<8x1xf32>
    %cst_52 = arith.constant 3.200000e+01 : f32
    %103 = vector.broadcast %cst_52 : f32 to vector<8x1xf32>
    %104 = arith.divf %102, %103 : vector<8x1xf32>
    %cst_53 = arith.constant 9.99999974E-6 : f32
    %105 = vector.broadcast %cst_53 : f32 to vector<8x1xf32>
    %106 = arith.addf %104, %105 : vector<8x1xf32>
    %107 = math.rsqrt %106 : vector<8x1xf32>
    %108 = vector.broadcast %107 : vector<8x1xf32> to vector<8x32xf32>
    %109 = arith.mulf %99, %108 : vector<8x32xf32>
    %c0_54 = arith.constant 0 : index
    %c0_55 = arith.constant 0 : index
    %110 = vector.load %arg5[%c0_54, %c0_55] : memref<32x64xbf16, #tpu.memory_space<vmem>>, vector<32x64xbf16>
    %111 = arith.truncf %109 : vector<8x32xf32> to vector<8x32xbf16>
    %cst_56 = arith.constant dense<0.000000e+00> : vector<8x64xf32>
    %112 = tpu.matmul %111, %110, %cst_56 {dimension_numbers = #tpu.dot_dimension_numbers<[1], [0], [0], [1], [0, 0, 1, 1], [], []>} : vector<8x32xbf16>, vector<32x64xbf16>, vector<8x64xf32> -> vector<8x64xf32>
    %c0_57 = arith.constant 0 : index
    %c0_58 = arith.constant 0 : index
    %113 = vector.load %arg6[%c0_57, %c0_58] : memref<1x64xf32, #tpu.memory_space<vmem>>, vector<1x64xf32>
    %114 = vector.broadcast %113 : vector<1x64xf32> to vector<8x64xf32>
    %115 = arith.addf %112, %114 : vector<8x64xf32>
    %116 = arith.truncf %115 : vector<8x64xf32> to vector<8x64xbf16>
    %c0_59 = arith.constant 0 : index
    %c0_60 = arith.constant 0 : index
    %c0_61 = arith.constant 0 : index
    %117 = vector.load %arg7[%c0_59, %c0_60, %c0_61] : memref<1x8x64xbf16, #tpu.memory_space<vmem>>, vector<1x8x64xbf16>
    %118 = vector.shape_cast %117 : vector<1x8x64xbf16> to vector<8x64xbf16>
    %119 = vector.shape_cast %116 : vector<8x64xbf16> to vector<1x8x64xbf16>
    tpu.vector_store %arg7[%c0_59, %c0_60, %c0_61], %119 {strides = array<i32>} : memref<1x8x64xbf16, #tpu.memory_space<vmem>>, vector<1x8x64xbf16>,
    return
  }
  func.func @transform_0(%arg0: i32, %arg1: i32) -> (i32, i32, i32, i32) {
    %c0_i32 = arith.constant 0 : i32
    %c0_i32_0 = arith.constant 0 : i32
    %c0_i32_1 = arith.constant 0 : i32
    return %arg0, %c0_i32, %arg1, %c0_i32_0 : i32, i32, i32, i32
  }
  func.func @transform_1(%arg0: i32, %arg1: i32) -> (i32, i32, i32) {
    %c0_i32 = arith.constant 0 : i32
    %c0_i32_0 = arith.constant 0 : i32
    %c0_i32_1 = arith.constant 0 : i32
    %c0_i32_2 = arith.constant 0 : i32
    return %c0_i32, %c0_i32_0, %c0_i32_1 : i32, i32, i32
  }
  func.func @transform_2(%arg0: i32, %arg1: i32) -> (i32, i32) {
    %c0_i32 = arith.constant 0 : i32
    %c0_i32_0 = arith.constant 0 : i32
    %c0_i32_1 = arith.constant 0 : i32
    return %c0_i32, %c0_i32_0 : i32, i32
  }
  func.func @transform_3(%arg0: i32, %arg1: i32) -> (i32, i32) {
    %c0_i32 = arith.constant 0 : i32
    %c0_i32_0 = arith.constant 0 : i32
    %c0_i32_1 = arith.constant 0 : i32
    return %c0_i32, %c0_i32_0 : i32, i32
  }
  func.func @transform_4(%arg0: i32, %arg1: i32) -> (i32, i32) {
    %c0_i32 = arith.constant 0 : i32
    %c0_i32_0 = arith.constant 0 : i32
    %c0_i32_1 = arith.constant 0 : i32
    return %c0_i32, %c0_i32_0 : i32, i32
  }
  func.func @transform_5(%arg0: i32, %arg1: i32) -> (i32, i32, i32) {
    %c0_i32 = arith.constant 0 : i32
    %c0_i32_0 = arith.constant 0 : i32
    return %arg0, %arg1, %c0_i32 : i32, i32, i32
  }
}

</mosaic_0001>

<llo_original>
// kernel: tpu_custom_call.1
$region0: #{tpu_custom_call.1}
  #allocation0 [shape = 'u32[]', space=smem, size = 0x4, offset = 0x4, fixed_abs, tag = 'smem constant byte address 0x4 - core index']
  #allocation1 [shape = 'u32[144,128]{1,0:T(1,128)}', space=vmem, size = 0x12000, scoped, tag = 'internal scratch']
  %s0 = inlined_call_operand.hbm [shape: f32[2,4,16,32], index: 0, kind: input, shape index: {}]
  %s1 = inlined_call_operand.hbm [shape: bf16[4,32,32], index: 1, kind: input, shape index: {}]
  %s2 = inlined_call_operand.vmem [shape: f32[1,32], index: 2, kind: input, shape index: {}]
  %s3 = inlined_call_operand.hbm [shape: bf16[32,64], index: 3, kind: input, shape index: {}]
  %s4 = inlined_call_operand.vmem [shape: f32[1,64], index: 4, kind: input, shape index: {}]
  %s5 = inlined_call_operand.hbm [shape: bf16[2,16,64], index: 5, kind: output, shape index: {}]
  %s6 = sld [smem:[#allocation0]]
  $region65: #{tpu_custom_call.1} parent=0
    _
  %s8 = ssub.s32 1, %s6
  %s9 = scalar_select 0, %s8, %s6
  $region1: #{tpu_custom_call.1} parent=0
    #allocation2 [shape = 'u8[32768]{0}', space=vmem, size = 0x8000, scoped, tag = 'input window, operand 0']
    #allocation3 [shape = 's32[2]{0}', space=sflag, size = 0x8, scoped, tag = 'scoped memory for tpu_custom_call.1']
    #allocation4 [shape = 's32[2]{0}', space=sflag, size = 0x8, scoped, tag = 'scoped memory for tpu_custom_call.1']
    #allocation5 [shape = 'u8[32768]{0}', space=vmem, size = 0x8000, scoped, tag = 'input window, operand 1, single buffered']
    #allocation6 [shape = 's32[1]{0}', space=sflag, size = 0x4, scoped, tag = 'scoped memory for tpu_custom_call.1']
    #allocation7 [shape = 'u8[8192]{0}', space=vmem, size = 0x2000, scoped, tag = 'input window, operand 3, single buffered']
    #allocation8 [shape = 'u8[4096]{0}', space=vmem, size = 0x1000, scoped, tag = 'output window, operand 0']
    %10 = vsyncpa [#allocation3], 0
    %s11 = scalar_lea.sflag [#allocation3], 1
    %12 = vsyncpa %s11, 0
    %13 = vsyncpa [#allocation6], 0
    %14 = vsyncpa [#allocation4], 0
    %s15 = scalar_lea.sflag [#allocation4], 1
    %16 = vsyncpa %s15, 0
    loop: start=0, step=1, limit=6
    $region2: #{tpu_custom_call.1} parent=1 // loop_pre_header
      _
    $region3: #{tpu_custom_call.1} parent=1 // loop_header
      %s18 = sphi 0, %s22
      %p19 = scmp.ge.s32.totalorder %s18, 6
      %s25 = sphi 0, %s37
      %s26 = sphi 0, %s33
      %s27 = sphi 0, %s25
      %s28 = sphi 0, %s26
      %s29 = sphi 0, %s27
      %s30 = sphi 0, %s28
      %s42 = sphi 0, %s44
      %s45 = sphi 0, %s42
      %s46 = sphi 0, %s45
      %s62 = sphi 0, %s46
      %s66 = sphi 0, %s66
      %s68 = sphi 0, %s66
      %s69 = sphi 0, %s68
      %s83 = sphi 0, %s69
      %s87 = sphi 0, %s87
      %s89 = sphi 0, %s87
      %s90 = sphi 0, %s89
      %s104 = sphi 0, %s90
      %s108 = sphi 0, %s108
      %s110 = sphi 0, %s108
      %s111 = sphi 0, %s110
      %s125 = sphi 0, %s111
      %s129 = sphi 0, %s129
      %s131 = sphi 0, %s129
      %s132 = sphi 0, %s131
      %s146 = sphi 0, %s132
      %s154 = sphi 0, %s156
      %s157 = sphi 0, %s154
      %s158 = sphi 0, %s157
      %s174 = sphi 0, %s158
    $region4: #{tpu_custom_call.1} parent=1 // loop_header_branch
      %21 = sbr.rel (%p19) target = $region8
    $region5: #{tpu_custom_call.1} parent=1 // loop_body
      %s23 = ssub.s32 %s18, 1
      %s24 = ssub.s32 %s18, 2
      %s31 = sadd.s32 1, %s26
      %p32 = scmp.ge.s32.totalorder %s31, 2
      %s33 = scalar_select %p32, 0, %s31
      %s34 = sadd.s32 1, %s25
      %s35 = scalar_select %p32, %s34, %s25
      %p36 = scmp.ge.s32.totalorder %s35, 2
      %s37 = scalar_select %p36, 0, %s35
      %s38 = ssub.s32 %s25, %s37
      %s39 = ssub.s32 %s26, %s33
      %s40 = sor.u32 %s38, %s39
      %p41 = scmp.eq.s32.totalorder %s40, 0
      %s43 = sadd.s32 %s42, 1
      %s44 = scalar_select %p41, %s42, %s43
      %p47 = pneg %p41
      %p48 = scmp.eq.s32.totalorder %s18, 3
      %p49 = por %p47, %p48
      %p50 = scmp.ne.s32.totalorder %s42, %s45
      %p51 = scmp.eq.s32.totalorder %s18, 0
      %p52 = por %p50, %p51
      %p53 = scmp.ne.s32.totalorder %s42, %s45
      %p54 = scmp.eq.s32.totalorder %s23, 3
      %p55 = por %p53, %p54
      %p56 = scmp.ne.s32.totalorder %s45, %s46
      %p57 = scmp.eq.s32.totalorder %s23, 0
      %p58 = por %p56, %p57
      %p59 = scmp.ne.s32.totalorder %s45, %s46
      %p60 = scmp.eq.s32.totalorder %s24, 3
      %p61 = por %p59, %p60
      %p63 = scmp.ne.s32.totalorder %s46, %s62
      %p64 = scmp.eq.s32.totalorder %s24, 0
      %p65 = por %p63, %p64
      %s67 = sadd.s32 %s66, 1
      %p70 = scmp.eq.s32.totalorder %s18, 3
      %p71 = scmp.ne.s32.totalorder %s66, %s68
      %p72 = scmp.eq.s32.totalorder %s18, 0
      %p73 = por %p71, %p72
      %p74 = scmp.ne.s32.totalorder %s66, %s68
      %p75 = scmp.eq.s32.totalorder %s23, 3
      %p76 = por %p74, %p75
      %p77 = scmp.ne.s32.totalorder %s68, %s69
      %p78 = scmp.eq.s32.totalorder %s23, 0
      %p79 = por %p77, %p78
      %p80 = scmp.ne.s32.totalorder %s68, %s69
      %p81 = scmp.eq.s32.totalorder %s24, 3
      %p82 = por %p80, %p81
      %p84 = scmp.ne.s32.totalorder %s69, %s83
      %p85 = scmp.eq.s32.totalorder %s24, 0
      %p86 = por %p84, %p85
      %s88 = sadd.s32 %s87, 1
      %p91 = scmp.eq.s32.totalorder %s18, 3
      %p92 = scmp.ne.s32.totalorder %s87, %s89
      %p93 = scmp.eq.s32.totalorder %s18, 0
      %p94 = por %p92, %p93
      %p95 = scmp.ne.s32.totalorder %s87, %s89
      %p96 = scmp.eq.s32.totalorder %s23, 3
      %p97 = por %p95, %p96
      %p98 = scmp.ne.s32.totalorder %s89, %s90
      %p99 = scmp.eq.s32.totalorder %s23, 0
      %p100 = por %p98, %p99
      %p101 = scmp.ne.s32.totalorder %s89, %s90
      %p102 = scmp.eq.s32.totalorder %s24, 3
      %p103 = por %p101, %p102
      %p105 = scmp.ne.s32.totalorder %s90, %s104
      %p106 = scmp.eq.s32.totalorder %s24, 0
      %p107 = por %p105, %p106
      %s109 = sadd.s32 %s108, 1
      %p112 = scmp.eq.s32.totalorder %s18, 3
      %p113 = scmp.ne.s32.totalorder %s108, %s110
      %p114 = scmp.eq.s32.totalorder %s18, 0
      %p115 = por %p113, %p114
      %p116 = scmp.ne.s32.totalorder %s108, %s110
      %p117 = scmp.eq.s32.totalorder %s23, 3
      %p118 = por %p116, %p117
      %p119 = scmp.ne.s32.totalorder %s110, %s111
      %p120 = scmp.eq.s32.totalorder %s23, 0
      %p121 = por %p119, %p120
      %p122 = scmp.ne.s32.totalorder %s110, %s111
      %p123 = scmp.eq.s32.totalorder %s24, 3
      %p124 = por %p122, %p123
      %p126 = scmp.ne.s32.totalorder %s111, %s125
      %p127 = scmp.eq.s32.totalorder %s24, 0
      %p128 = por %p126, %p127
      %s130 = sadd.s32 %s129, 1
      %p133 = scmp.eq.s32.totalorder %s18, 3
      %p134 = scmp.ne.s32.totalorder %s129, %s131
      %p135 = scmp.eq.s32.totalorder %s18, 0
      %p136 = por %p134, %p135
      %p137 = scmp.ne.s32.totalorder %s129, %s131
      %p138 = scmp.eq.s32.totalorder %s23, 3
      %p139 = por %p137, %p138
      %p140 = scmp.ne.s32.totalorder %s131, %s132
      %p141 = scmp.eq.s32.totalorder %s23, 0
      %p142 = por %p140, %p141
      %p143 = scmp.ne.s32.totalorder %s131, %s132
      %p144 = scmp.eq.s32.totalorder %s24, 3
      %p145 = por %p143, %p144
      %p147 = scmp.ne.s32.totalorder %s132, %s146
      %p148 = scmp.eq.s32.totalorder %s24, 0
      %p149 = por %p147, %p148
      %s150 = ssub.s32 %s25, %s37
      %s151 = ssub.s32 %s26, %s33
      %s152 = sor.u32 %s150, %s151
      %p153 = scmp.eq.s32.totalorder %s152, 0
      %s155 = sadd.s32 %s154, 1
      %s156 = scalar_select %p153, %s154, %s155
      %p159 = pneg %p153
      %p160 = scmp.eq.s32.totalorder %s18, 3
      %p161 = por %p159, %p160
      %p162 = scmp.ne.s32.totalorder %s154, %s157
      %p163 = scmp.eq.s32.totalorder %s18, 0
      %p164 = por %p162, %p163
      %p165 = scmp.ne.s32.totalorder %s154, %s157
      %p166 = scmp.eq.s32.totalorder %s23, 3
      %p167 = por %p165, %p166
      %p168 = scmp.ne.s32.totalorder %s157, %s158
      %p169 = scmp.eq.s32.totalorder %s23, 0
      %p170 = por %p168, %p169
      %p171 = scmp.ne.s32.totalorder %s157, %s158
      %p172 = scmp.eq.s32.totalorder %s24, 3
      %p173 = por %p171, %p172
      %p175 = scmp.ne.s32.totalorder %s158, %s174
      %p176 = scmp.eq.s32.totalorder %s24, 0
      %p177 = por %p175, %p176
      %p178 = scmp.le.s32.totalorder 1, %s18
      %p179 = scmp.lt.s32.totalorder %s18, 5
      %p180 = pnand %p178, %p179
      %p181 = pneg %p180
      // Predicated region
      $region9: #{tpu_custom_call.1} parent=5 // pred_check
        _
      $region10: #{tpu_custom_call.1} parent=5 // pred_check_branch
        %183 = sbr.rel (%p180) target = $region12
      $region11: #{tpu_custom_call.1} parent=5 // pred_region
        %s184 = ssub.s32 %s18, 1
        // Predicated region
        $region13: #{tpu_custom_call.1} parent=11 // pred_check
          %p185 = pneg %p79
        $region14: #{tpu_custom_call.1} parent=11 // pred_check_branch
          %187 = sbr.rel (%p185) target = $region16
        $region15: #{tpu_custom_call.1} parent=11 // pred_region
          %s189 = ssub.s32 1024, 1024
          %190 = vsyncadd [#allocation6], %s189
          %s191 = sshll.u32 [#allocation5], 4
          %s192 = int_to_ptr.vmem [resolvable:$true] %s191
          %197 = dma.hbm_to_vmem [thread:$0]  %s1, 1024, %s192, [#allocation6], 64, 64, 4
        $region16: #{tpu_custom_call.1} parent=11 // pred_fallthru
          _
        // Predicated region
        $region17: #{tpu_custom_call.1} parent=11 // pred_check
          %p198 = pneg %p100
        $region18: #{tpu_custom_call.1} parent=11 // pred_check_branch
          %200 = sbr.rel (%p198) target = $region20
        $region19: #{tpu_custom_call.1} parent=11 // pred_region
          _
        $region20: #{tpu_custom_call.1} parent=11 // pred_fallthru
          _
        // Predicated region
        $region21: #{tpu_custom_call.1} parent=11 // pred_check
          %p201 = pneg %p121
        $region22: #{tpu_custom_call.1} parent=11 // pred_check_branch
          %203 = sbr.rel (%p201) target = $region24
        $region23: #{tpu_custom_call.1} parent=11 // pred_region
          %s205 = ssub.s32 256, 256
          %206 = vsyncadd [#allocation6], %s205
          %s207 = sshll.u32 [#allocation7], 4
          %s208 = int_to_ptr.vmem [resolvable:$true] %s207
          %213 = dma.hbm_to_vmem [thread:$0]  %s3, 256, %s208, [#allocation6], 64, 64, 4
        $region24: #{tpu_custom_call.1} parent=11 // pred_fallthru
          _
        // Predicated region
        $region25: #{tpu_custom_call.1} parent=11 // pred_check
          %p214 = pneg %p142
        $region26: #{tpu_custom_call.1} parent=11 // pred_check_branch
          %216 = sbr.rel (%p214) target = $region28
        $region27: #{tpu_custom_call.1} parent=11 // pred_region
          _
        $region28: #{tpu_custom_call.1} parent=11 // pred_fallthru
          _
      $region12: #{tpu_custom_call.1} parent=5 // pred_fallthru
        _
      %p217 = scmp.lt.s32.totalorder %s18, 4
      // Predicated region
      $region29: #{tpu_custom_call.1} parent=5 // pred_check
        %p218 = pneg %p217
      $region30: #{tpu_custom_call.1} parent=5 // pred_check_branch
        %220 = sbr.rel (%p218) target = $region32
      $region31: #{tpu_custom_call.1} parent=5 // pred_region
        // Predicated region
        $region33: #{tpu_custom_call.1} parent=31 // pred_check
          %p221 = pneg %p52
        $region34: #{tpu_custom_call.1} parent=31 // pred_check_branch
          %223 = sbr.rel (%p221) target = $region36
        $region35: #{tpu_custom_call.1} parent=31 // pred_region
          %s224 = sand.u32 %s42, 1
          %s225 = scalar_lea.sflag [#allocation3], %s224
          %s226 = sand.u32 %s42, 1
          %s227 = smul.addr %s226, 32
          %s228 = scalar_lea.vmem [#allocation2], %s227
          %s230 = ssub.s32 512, 512
          %231 = vsyncadd %s225, %s230
          %s232 = smul.addr %s25, 8
          %s233 = sadd.s32 %s26, %s232
          %s234 = smul.addr %s233, 128
          %s235 = scalar_lea.hbm %s0, %s234
          %s236 = sshll.u32 %s228, 4
          %s237 = int_to_ptr.vmem [resolvable:$true] %s236
          %242 = dma.hbm_to_vmem [thread:$0]  %s235, 512, %s237, %s225, 256, 128, 8
        $region36: #{tpu_custom_call.1} parent=31 // pred_fallthru
          _
      $region32: #{tpu_custom_call.1} parent=5 // pred_fallthru
        _
      %p243 = scmp.le.s32.totalorder 1, %s18
      %p244 = scmp.lt.s32.totalorder %s18, 5
      %p245 = pnand %p243, %p244
      %p246 = pneg %p245
      // Predicated region
      $region37: #{tpu_custom_call.1} parent=5 // pred_check
        _
      $region38: #{tpu_custom_call.1} parent=5 // pred_check_branch
        %248 = sbr.rel (%p245) target = $region40
      $region39: #{tpu_custom_call.1} parent=5 // pred_region
        %s249 = ssub.s32 %s18, 1
        %s250 = sand.u32 %s45, 1
        %s251 = scalar_lea.sflag [#allocation3], %s250
        %s252 = sand.u32 %s45, 1
        %s253 = smul.addr %s252, 32
        %s254 = scalar_lea.vmem [#allocation2], %s253
        // Predicated region
        $region41: #{tpu_custom_call.1} parent=39 // pred_check
          %p255 = pneg %p58
        $region42: #{tpu_custom_call.1} parent=39 // pred_check_branch
          %257 = sbr.rel (%p255) target = $region44
        $region43: #{tpu_custom_call.1} parent=39 // pred_region
          %258 = dma.done %s251, 512
        $region44: #{tpu_custom_call.1} parent=39 // pred_fallthru
          _
        // Predicated region
        $region45: #{tpu_custom_call.1} parent=39 // pred_check
          %p259 = pneg %p79
        $region46: #{tpu_custom_call.1} parent=39 // pred_check_branch
          %261 = sbr.rel (%p259) target = $region48
        $region47: #{tpu_custom_call.1} parent=39 // pred_region
          %262 = dma.done [#allocation6], 1024
        $region48: #{tpu_custom_call.1} parent=39 // pred_fallthru
          _
        // Predicated region
        $region49: #{tpu_custom_call.1} parent=39 // pred_check
          %p263 = pneg %p121
        $region50: #{tpu_custom_call.1} parent=39 // pred_check_branch
          %265 = sbr.rel (%p263) target = $region52
        $region51: #{tpu_custom_call.1} parent=39 // pred_region
          %266 = dma.done [#allocation6], 256
        $region52: #{tpu_custom_call.1} parent=39 // pred_fallthru
          _
        %s267 = sand.u32 %s45, 1
        %s268 = scalar_lea.sflag [#allocation3], %s267
        %s269 = sand.u32 %s45, 1
        %s270 = smul.addr %s269, 32
        %s271 = scalar_lea.vmem [#allocation2], %s270
        %p272 = pneg %p58
        %p273 = pneg %p55
        %p274 = pneg %p79
        %p275 = pneg %p76
        %p276 = pneg %p100
        %p277 = pneg %p97
        %p278 = pneg %p121
        %p279 = pneg %p118
        %p280 = pneg %p142
        %p281 = pneg %p139
        %p282 = pneg %p170
        %p283 = pneg %p167
        %s284 = sand.u32 %s157, 1
        %s285 = scalar_lea.sflag [#allocation4], %s284
        %s286 = sand.u32 %s157, 1
        %s287 = smul.addr %s286, 4
        %s288 = scalar_lea.vmem [#allocation8], %s287
        %v290 = vld [vmem:[%s254] sm:$0xff]
        %vm291 = vcmask 261120
        %v292 = vsel %vm291, %v290, 0.0
        %293 = vadd.xlane.f32.xlu0 %v292
        %v294 = vpop.xlane.xlu0 %293
        %v295 = vrcp.pop 32.0
        %v296 = vmul.f32 %v294, %v295
        %v297 = vsub.f32 %v290, %v296
        %v298 = vmul.f32 %v297, %v297
        %v299 = vsel %vm291, %v298, 0.0
        %300 = vadd.xlane.f32.xlu0 %v299
        %v301 = vpop.xlane.xlu0 %300
        %v302 = vmul.f32 %v301, %v295
        %v303 = vadd.f32 %v302, 1e-05
        %v304 = vrsqrt.pop %v303
        %v305 = vmul.f32 %v297, %v304
        %v306 = vld [vmem:[#allocation5] sm:$0xf]
        %v307 = vld [vmem:[#allocation5 + $0x4] sm:$0xf]
        %v308 = vld [vmem:[#allocation5 + $0x8] sm:$0xf]
        %v309 = vld [vmem:[#allocation5 + $0xc] sm:$0xf]
        %v310 = vpack.c.bf16 %v305, %v305
        %s311 = scalar_lea.vmem %s254, 8 [#allocation2]
        %v312 = vld [vmem:[%s311] sm:$0xff]
        %v313 = vsel %vm291, %v312, 0.0
        %314 = vadd.xlane.f32.xlu0 %v313
        %v315 = vpop.xlane.xlu0 %314
        %v316 = vmul.f32 %v315, %v295
        %v317 = vsub.f32 %v312, %v316
        %v318 = vmul.f32 %v317, %v317
        %v319 = vsel %vm291, %v318, 0.0
        %320 = vadd.xlane.f32.xlu0 %v319
        %v321 = vpop.xlane.xlu0 %320
        %v322 = vmul.f32 %v321, %v295
        %v323 = vadd.f32 %v322, 1e-05
        %v324 = vrsqrt.pop %v323
        %v325 = vmul.f32 %v317, %v324
        %s326 = scalar_lea.vmem [#allocation5], 16
        %v327 = vld [vmem:[%s326] sm:$0xf]
        %v328 = vld [vmem:[%s326 + $0x4] sm:$0xf]
        %v329 = vld [vmem:[%s326 + $0x8] sm:$0xf]
        %v330 = vld [vmem:[%s326 + $0xc] sm:$0xf]
        %v331 = vpack.c.bf16 %v325, %v325
        %v336 = vunpack.c.l.b16 %v327
        %v337 = vunpack.c.l.b16 %v328
        %v338 = vunpack.c.l.b16 %v329
        %v339 = vunpack.c.l.b16 %v330
        %v340 = vpack.c.b16 %v337, %v336
        %v341 = vpack.c.b16 %v339, %v338
        %v345 = vsel %vm291, %v331, 0
        %347 = vmatprep.subr.bf16.mxu0 0
        %348 = vmatpush1.bf16.msra.mxu0 %v340
        %349 = vmatprep.subr.bf16.mxu0 0
        %350 = vmatpush1.bf16.msra.mxu0 %v341
        %351 = vmatprep.subr.bf16.mxu0 0
        %352 = vmatpush1.bf16.msra.mxu0 0
        %353 = vmatprep.subr.bf16.mxu0 0
        %354 = vmatpush1.bf16.msra.mxu0 0
        %355 = vmatprep.subr.bf16.mxu0 0
        %356 = vmatpush1.bf16.msra.mxu0 0
        %357 = vmatprep.subr.bf16.mxu0 0
        %358 = vmatpush1.bf16.msra.mxu0 0
        %359 = vmatprep.subr.bf16.mxu0 0
        %360 = vmatpush1.bf16.msra.mxu0 0
        %361 = vmatprep.subr.bf16.mxu0 0
        %362 = vmatpush1.bf16.msra.mxu0 0
        %363 = vmatprep.subr.bf16.mxu0 0
        %364 = vmatpush1.bf16.msra.mxu0 0
        %365 = vmatprep.subr.bf16.mxu0 0
        %366 = vmatpush1.bf16.msra.mxu0 0
        %367 = vmatprep.subr.bf16.mxu0 0
        %368 = vmatpush1.bf16.msra.mxu0 0
        %369 = vmatprep.subr.bf16.mxu0 0
        %370 = vmatpush1.bf16.msra.mxu0 0
        %371 = vmatprep.subr.bf16.mxu0 0
        %372 = vmatpush1.bf16.msra.mxu0 0
        %373 = vmatprep.subr.bf16.mxu0 0
        %374 = vmatpush1.bf16.msra.mxu0 0
        %375 = vmatprep.subr.bf16.mxu0 0
        %376 = vmatpush1.bf16.msra.mxu0 0
        %377 = vmatprep.subr.bf16.mxu0 0
        %378 = vmatpush1.bf16.msra.mxu0 0
        %379 = vmatprep.mubr.bf16.mxu0 0
        %380 = vmatmul.mubr.bf16.gmra.mrb[0].mxu0 %v345
        %v381 = vpop.f32.mrb[0].mxu0
        %v382 = vadd.f32 0.0, %v381
        %v383 = vpop.f32.mrb[0].mxu0
        %v384 = vpop.f32.mrb[0].mxu0
        %v385 = vpop.f32.mrb[0].mxu0
        %386 = vdwg.mxu0
        %v391 = vunpack.c.l.b16 %v306
        %v392 = vunpack.c.l.b16 %v307
        %v393 = vunpack.c.l.b16 %v308
        %v394 = vunpack.c.l.b16 %v309
        %v395 = vpack.c.b16 %v392, %v391
        %v396 = vpack.c.b16 %v394, %v393
        %v400 = vsel %vm291, %v310, 0
        %402 = vmatprep.subr.bf16.mxu0 0
        %403 = vmatpush1.bf16.msra.mxu0 %v395
        %404 = vmatprep.subr.bf16.mxu0 0
        %405 = vmatpush1.bf16.msra.mxu0 %v396
        %406 = vmatprep.subr.bf16.mxu0 0
        %407 = vmatpush1.bf16.msra.mxu0 0
        %408 = vmatprep.subr.bf16.mxu0 0
        %409 = vmatpush1.bf16.msra.mxu0 0
        %410 = vmatprep.subr.bf16.mxu0 0
        %411 = vmatpush1.bf16.msra.mxu0 0
        %412 = vmatprep.subr.bf16.mxu0 0
        %413 = vmatpush1.bf16.msra.mxu0 0
        %414 = vmatprep.subr.bf16.mxu0 0
        %415 = vmatpush1.bf16.msra.mxu0 0
        %416 = vmatprep.subr.bf16.mxu0 0
        %417 = vmatpush1.bf16.msra.mxu0 0
        %418 = vmatprep.subr.bf16.mxu0 0
        %419 = vmatpush1.bf16.msra.mxu0 0
        %420 = vmatprep.subr.bf16.mxu0 0
        %421 = vmatpush1.bf16.msra.mxu0 0
        %422 = vmatprep.subr.bf16.mxu0 0
        %423 = vmatpush1.bf16.msra.mxu0 0
        %424 = vmatprep.subr.bf16.mxu0 0
        %425 = vmatpush1.bf16.msra.mxu0 0
        %426 = vmatprep.subr.bf16.mxu0 0
        %427 = vmatpush1.bf16.msra.mxu0 0
        %428 = vmatprep.subr.bf16.mxu0 0
        %429 = vmatpush1.bf16.msra.mxu0 0
        %430 = vmatprep.subr.bf16.mxu0 0
        %431 = vmatpush1.bf16.msra.mxu0 0
        %432 = vmatprep.subr.bf16.mxu0 0
        %433 = vmatpush1.bf16.msra.mxu0 0
        %434 = vmatprep.mubr.bf16.mxu0 0
        %435 = vmatmul.mubr.bf16.gmra.mrb[0].mxu0 %v400
        %v436 = vpop.f32.mrb[0].mxu0
        %v437 = vadd.f32 %v382, %v436
        %v438 = vpop.f32.mrb[0].mxu0
        %v439 = vpop.f32.mrb[0].mxu0
        %v440 = vpop.f32.mrb[0].mxu0
        %441 = vdwg.mxu0
        %s442 = scalar_lea.vmem %s254, 16 [#allocation2]
        %v443 = vld [vmem:[%s442] sm:$0xff]
        %v444 = vsel %vm291, %v443, 0.0
        %445 = vadd.xlane.f32.xlu0 %v444
        %v446 = vpop.xlane.xlu0 %445
        %v447 = vmul.f32 %v446, %v295
        %v448 = vsub.f32 %v443, %v447
        %v449 = vmul.f32 %v448, %v448
        %v450 = vsel %vm291, %v449, 0.0
        %451 = vadd.xlane.f32.xlu0 %v450
        %v452 = vpop.xlane.xlu0 %451
        %v453 = vmul.f32 %v452, %v295
        %v454 = vadd.f32 %v453, 1e-05
        %v455 = vrsqrt.pop %v454
        %v456 = vmul.f32 %v448, %v455
        %s457 = scalar_lea.vmem [#allocation5], 32
        %v458 = vld [vmem:[%s457] sm:$0xf]
        %v459 = vld [vmem:[%s457 + $0x4] sm:$0xf]
        %v460 = vld [vmem:[%s457 + $0x8] sm:$0xf]
        %v461 = vld [vmem:[%s457 + $0xc] sm:$0xf]
        %v462 = vpack.c.bf16 %v456, %v456
        %v467 = vunpack.c.l.b16 %v458
        %v468 = vunpack.c.l.b16 %v459
        %v469 = vunpack.c.l.b16 %v460
        %v470 = vunpack.c.l.b16 %v461
        %v471 = vpack.c.b16 %v468, %v467
        %v472 = vpack.c.b16 %v470, %v469
        %v476 = vsel %vm291, %v462, 0
        %478 = vmatprep.subr.bf16.mxu0 0
        %479 = vmatpush1.bf16.msra.mxu0 %v471
        %480 = vmatprep.subr.bf16.mxu0 0
        %481 = vmatpush1.bf16.msra.mxu0 %v472
        %482 = vmatprep.subr.bf16.mxu0 0
        %483 = vmatpush1.bf16.msra.mxu0 0
        %484 = vmatprep.subr.bf16.mxu0 0
        %485 = vmatpush1.bf16.msra.mxu0 0
        %486 = vmatprep.subr.bf16.mxu0 0
        %487 = vmatpush1.bf16.msra.mxu0 0
        %488 = vmatprep.subr.bf16.mxu0 0
        %489 = vmatpush1.bf16.msra.mxu0 0
        %490 = vmatprep.subr.bf16.mxu0 0
        %491 = vmatpush1.bf16.msra.mxu0 0
        %492 = vmatprep.subr.bf16.mxu0 0
        %493 = vmatpush1.bf16.msra.mxu0 0
        %494 = vmatprep.subr.bf16.mxu0 0
        %495 = vmatpush1.bf16.msra.mxu0 0
        %496 = vmatprep.subr.bf16.mxu0 0
        %497 = vmatpush1.bf16.msra.mxu0 0
        %498 = vmatprep.subr.bf16.mxu0 0
        %499 = vmatpush1.bf16.msra.mxu0 0
        %500 = vmatprep.subr.bf16.mxu0 0
        %501 = vmatpush1.bf16.msra.mxu0 0
        %502 = vmatprep.subr.bf16.mxu0 0
        %503 = vmatpush1.bf16.msra.mxu0 0
        %504 = vmatprep.subr.bf16.mxu0 0
        %505 = vmatpush1.bf16.msra.mxu0 0
        %506 = vmatprep.subr.bf16.mxu0 0
        %507 = vmatpush1.bf16.msra.mxu0 0
        %508 = vmatprep.subr.bf16.mxu0 0
        %509 = vmatpush1.bf16.msra.mxu0 0
        %510 = vmatprep.mubr.bf16.mxu0 0
        %511 = vmatmul.mubr.bf16.gmra.mrb[0].mxu0 %v476
        %v512 = vpop.f32.mrb[0].mxu0
        %v513 = vadd.f32 0.0, %v512
        %v514 = vpop.f32.mrb[0].mxu0
        %v515 = vpop.f32.mrb[0].mxu0
        %v516 = vpop.f32.mrb[0].mxu0
        %517 = vdwg.mxu0
        %v518 = vadd.f32 %v437, %v513
        %s519 = scalar_lea.vmem %s254, 24 [#allocation2]
        %v520 = vld [vmem:[%s519] sm:$0xff]
        %v521 = vsel %vm291, %v520, 0.0
        %522 = vadd.xlane.f32.xlu0 %v521
        %v523 = vpop.xlane.xlu0 %522
        %v524 = vmul.f32 %v523, %v295
        %v525 = vsub.f32 %v520, %v524
        %v526 = vmul.f32 %v525, %v525
        %v527 = vsel %vm291, %v526, 0.0
        %528 = vadd.xlane.f32.xlu0 %v527
        %v529 = vpop.xlane.xlu0 %528
        %v530 = vmul.f32 %v529, %v295
        %v531 = vadd.f32 %v530, 1e-05
        %v532 = vrsqrt.pop %v531
        %v533 = vmul.f32 %v525, %v532
        %s534 = scalar_lea.vmem [#allocation5], 48
        %v535 = vld [vmem:[%s534] sm:$0xf]
        %v536 = vld [vmem:[%s534 + $0x4] sm:$0xf]
        %v537 = vld [vmem:[%s534 + $0x8] sm:$0xf]
        %v538 = vld [vmem:[%s534 + $0xc] sm:$0xf]
        %v539 = vpack.c.bf16 %v533, %v533
        %v544 = vunpack.c.l.b16 %v535
        %v545 = vunpack.c.l.b16 %v536
        %v546 = vunpack.c.l.b16 %v537
        %v547 = vunpack.c.l.b16 %v538
        %v548 = vpack.c.b16 %v545, %v544
        %v549 = vpack.c.b16 %v547, %v546
        %v553 = vsel %vm291, %v539, 0
        %555 = vmatprep.subr.bf16.mxu0 0
        %556 = vmatpush1.bf16.msra.mxu0 %v548
        %557 = vmatprep.subr.bf16.mxu0 0
        %558 = vmatpush1.bf16.msra.mxu0 %v549
        %559 = vmatprep.subr.bf16.mxu0 0
        %560 = vmatpush1.bf16.msra.mxu0 0
        %561 = vmatprep.subr.bf16.mxu0 0
        %562 = vmatpush1.bf16.msra.mxu0 0
        %563 = vmatprep.subr.bf16.mxu0 0
        %564 = vmatpush1.bf16.msra.mxu0 0
        %565 = vmatprep.subr.bf16.mxu0 0
        %566 = vmatpush1.bf16.msra.mxu0 0
        %567 = vmatprep.subr.bf16.mxu0 0
        %568 = vmatpush1.bf16.msra.mxu0 0
        %569 = vmatprep.subr.bf16.mxu0 0
        %570 = vmatpush1.bf16.msra.mxu0 0
        %571 = vmatprep.subr.bf16.mxu0 0
        %572 = vmatpush1.bf16.msra.mxu0 0
        %573 = vmatprep.subr.bf16.mxu0 0
        %574 = vmatpush1.bf16.msra.mxu0 0
        %575 = vmatprep.subr.bf16.mxu0 0
        %576 = vmatpush1.bf16.msra.mxu0 0
        %577 = vmatprep.subr.bf16.mxu0 0
        %578 = vmatpush1.bf16.msra.mxu0 0
        %579 = vmatprep.subr.bf16.mxu0 0
        %580 = vmatpush1.bf16.msra.mxu0 0
        %581 = vmatprep.subr.bf16.mxu0 0
        %582 = vmatpush1.bf16.msra.mxu0 0
        %583 = vmatprep.subr.bf16.mxu0 0
        %584 = vmatpush1.bf16.msra.mxu0 0
        %585 = vmatprep.subr.bf16.mxu0 0
        %586 = vmatpush1.bf16.msra.mxu0 0
        %587 = vmatprep.mubr.bf16.mxu0 0
        %588 = vmatmul.mubr.bf16.gmra.mrb[0].mxu0 %v553
        %v589 = vpop.f32.mrb[0].mxu0
        %v590 = vadd.f32 0.0, %v589
        %v591 = vpop.f32.mrb[0].mxu0
        %v592 = vpop.f32.mrb[0].mxu0
        %v593 = vpop.f32.mrb[0].mxu0
        %594 = vdwg.mxu0
        %v595 = vadd.f32 %v518, %v590
        %v596 = vld [vmem:[%s2] sm:$0x1]
        %v598 = vlaneseq
        %v599 = vshrl.u32 %v598, 7
        %v600 = vsub.s32 0, %v599
        %v601 = vrot.slane %v596, %v600
        %v603 = vadd.f32 %v595, %v601
        %v604 = vsel %vm291, %v603, 0.0
        %605 = vadd.xlane.f32.xlu0 %v604
        %v606 = vpop.xlane.xlu0 %605
        %v607 = vmul.f32 %v606, %v295
        %v608 = vsub.f32 %v603, %v607
        %v609 = vmul.f32 %v608, %v608
        %v610 = vsel %vm291, %v609, 0.0
        %611 = vadd.xlane.f32.xlu0 %v610
        %v612 = vpop.xlane.xlu0 %611
        %v613 = vmul.f32 %v612, %v295
        %v614 = vadd.f32 %v613, 1e-05
        %v615 = vrsqrt.pop %v614
        %v616 = vmul.f32 %v608, %v615
        %v617 = vld [vmem:[#allocation7] sm:$0xf]
        %v618 = vld [vmem:[#allocation7 + $0x4] sm:$0xf]
        %v619 = vld [vmem:[#allocation7 + $0x8] sm:$0xf]
        %v620 = vld [vmem:[#allocation7 + $0xc] sm:$0xf]
        %v621 = vpack.c.bf16 %v616, %v616
        %v622 = vld [vmem:[%s4] sm:$0x1]
        %v624 = vlaneseq
        %v625 = vshrl.u32 %v624, 7
        %v626 = vsub.s32 0, %v625
        %v627 = vrot.slane %v622, %v626
        %v633 = vunpack.c.l.b16 %v617
        %v634 = vunpack.c.l.b16 %v618
        %v635 = vunpack.c.l.b16 %v619
        %v636 = vunpack.c.l.b16 %v620
        %v637 = vpack.c.b16 %v634, %v633
        %v638 = vpack.c.b16 %v636, %v635
        %v642 = vsel %vm291, %v621, 0
        %644 = vmatprep.subr.bf16.mxu0 0
        %645 = vmatpush1.bf16.msra.mxu0 %v637
        %646 = vmatprep.subr.bf16.mxu0 0
        %647 = vmatpush1.bf16.msra.mxu0 %v638
        %648 = vmatprep.subr.bf16.mxu0 0
        %649 = vmatpush1.bf16.msra.mxu0 0
        %650 = vmatprep.subr.bf16.mxu0 0
        %651 = vmatpush1.bf16.msra.mxu0 0
        %652 = vmatprep.subr.bf16.mxu0 0
        %653 = vmatpush1.bf16.msra.mxu0 0
        %654 = vmatprep.subr.bf16.mxu0 0
        %655 = vmatpush1.bf16.msra.mxu0 0
        %656 = vmatprep.subr.bf16.mxu0 0
        %657 = vmatpush1.bf16.msra.mxu0 0
        %658 = vmatprep.subr.bf16.mxu0 0
        %659 = vmatpush1.bf16.msra.mxu0 0
        %660 = vmatprep.subr.bf16.mxu0 0
        %661 = vmatpush1.bf16.msra.mxu0 0
        %662 = vmatprep.subr.bf16.mxu0 0
        %663 = vmatpush1.bf16.msra.mxu0 0
        %664 = vmatprep.subr.bf16.mxu0 0
        %665 = vmatpush1.bf16.msra.mxu0 0
        %666 = vmatprep.subr.bf16.mxu0 0
        %667 = vmatpush1.bf16.msra.mxu0 0
        %668 = vmatprep.subr.bf16.mxu0 0
        %669 = vmatpush1.bf16.msra.mxu0 0
        %670 = vmatprep.subr.bf16.mxu0 0
        %671 = vmatpush1.bf16.msra.mxu0 0
        %672 = vmatprep.subr.bf16.mxu0 0
        %673 = vmatpush1.bf16.msra.mxu0 0
        %674 = vmatprep.subr.bf16.mxu0 0
        %675 = vmatpush1.bf16.msra.mxu0 0
        %676 = vmatprep.mubr.bf16.mxu0 0
        %677 = vmatmul.mubr.bf16.gmra.mrb[0].mxu0 %v642
        %v678 = vpop.f32.mrb[0].mxu0
        %v679 = vadd.f32 %v627, %v678
        %v680 = vpop.f32.mrb[0].mxu0
        %v681 = vpop.f32.mrb[0].mxu0
        %v682 = vpop.f32.mrb[0].mxu0
        %683 = vdwg.mxu0
        %v684 = vpack.c.bf16 %v679, %v679
        %vm685 = vcmask 519168
        %686 = vst.msk [vmem:[%s288] sm:$0xf] %vm685, %v684
        %s687 = sand.u32 %s157, 1
        %s688 = scalar_lea.sflag [#allocation4], %s687
        %s689 = sand.u32 %s157, 1
        %s690 = smul.addr %s689, 4
        %s691 = scalar_lea.vmem [#allocation8], %s690
        // Predicated region
        $region53: #{tpu_custom_call.1} parent=39 // pred_check
          %p692 = pneg %p167
        $region54: #{tpu_custom_call.1} parent=39 // pred_check_branch
          %694 = sbr.rel (%p692) target = $region56
        $region55: #{tpu_custom_call.1} parent=39 // pred_region
          %s696 = ssub.s32 64, 64
          %697 = vsyncadd %s688, %s696
          %s698 = smul.addr %s27, 2
          %s699 = sadd.s32 %s28, %s698
          %s700 = smul.addr %s699, 64
          %s701 = scalar_lea.hbm %s5, %s700
          %s703 = sshll.u32 %s691, 4
          %s704 = int_to_ptr.vmem [resolvable:$true] %s703
          %706 = dma.vmem_to_hbm [thread:$0]  %s704, 64, %s701, %s688
        $region56: #{tpu_custom_call.1} parent=39 // pred_fallthru
          _
      $region40: #{tpu_custom_call.1} parent=5 // pred_fallthru
        _
      %p707 = scmp.le.s32.totalorder 2, %s18
      // Predicated region
      $region57: #{tpu_custom_call.1} parent=5 // pred_check
        %p708 = pneg %p707
      $region58: #{tpu_custom_call.1} parent=5 // pred_check_branch
        %710 = sbr.rel (%p708) target = $region60
      $region59: #{tpu_custom_call.1} parent=5 // pred_region
        %s711 = ssub.s32 %s18, 2
        // Predicated region
        $region61: #{tpu_custom_call.1} parent=59 // pred_check
          %p712 = pneg %p173
        $region62: #{tpu_custom_call.1} parent=59 // pred_check_branch
          %714 = sbr.rel (%p712) target = $region64
        $region63: #{tpu_custom_call.1} parent=59 // pred_region
          %s715 = sand.u32 %s158, 1
          %s716 = scalar_lea.sflag [#allocation4], %s715
          %s717 = sand.u32 %s158, 1
          %s718 = smul.addr %s717, 4
          %s719 = scalar_lea.vmem [#allocation8], %s718
          %720 = dma.done %s716, 64
        $region64: #{tpu_custom_call.1} parent=59 // pred_fallthru
          _
      $region60: #{tpu_custom_call.1} parent=5 // pred_fallthru
        _
    $region6: #{tpu_custom_call.1} parent=1 // loop_footer
      %s22 = sadd.s32 1, %s18
    $region7: #{tpu_custom_call.1} parent=1 // loop_footer_branch
      %17 = sbr.rel target = $region3
    $region8: #{tpu_custom_call.1} parent=1 // loop_exit
      _
    %721 = vsyncpa [#allocation3], 1
    %s722 = scalar_lea.sflag [#allocation3], 1
    %723 = vsyncpa %s722, 1
    %724 = vsyncpa [#allocation6], 1
    %725 = vsyncpa [#allocation4], 1
    %s726 = scalar_lea.sflag [#allocation4], 1
    %727 = vsyncpa %s726, 1

</llo_original>
